<compile_context>
chip_gen: v7x
topology: tpu7x:2x2x1
jax: 0.10.0
libtpu: 0.0.40
codegen_flags: <defaults>
</compile_context>

<pallas_src>
import functools

import jax
import jax.numpy as jnp
from jax import lax
from jax.experimental import pallas as pl
from jax.experimental.pallas import tpu as pltpu


_INV_SQRT2 = 0.7071067811865476


def _gelu_exact(x):
    # PyTorch nn.GELU() default: exact erf formulation (evaluated in f32).
    return 0.5 * x * (1.0 + lax.erf(x * _INV_SQRT2))


def _round_up(x, m):
    return ((x + m - 1) // m) * m


def _operator_flow_kernel(h_ref, w0_ref, b0_ref, w1_ref, b1_ref, w2_ref, b2_ref,
                          o_ref):
    cdt = w0_ref.dtype                    # MXU compute dtype (params' dtype)

    # Layer 0: Linear (native-dtype MXU, f32 accumulate) + exact-erf GELU (f32).
    x = jnp.dot(h_ref[...].astype(cdt), w0_ref[...],
                preferred_element_type=jnp.float32)
    x = _gelu_exact(x + b0_ref[...].astype(jnp.float32))

    # Layer 1: Linear + GELU.
    x = jnp.dot(x.astype(cdt), w1_ref[...], preferred_element_type=jnp.float32)
    x = _gelu_exact(x + b1_ref[...].astype(jnp.float32))

    # Layer 2: final Linear (no activation), back to the unpadded width.
    x = jnp.dot(x.astype(cdt), w2_ref[...], preferred_element_type=jnp.float32)
    x = x + b2_ref[...].astype(jnp.float32)

    # Residual: re-read the (already VMEM-resident) input tile here instead of
    # holding it live across all three matmuls.
    o_ref[...] = (h_ref[...].astype(jnp.float32) + x).astype(o_ref.dtype)


def _vmem_capacity_bytes():
    try:
        return int(pltpu.get_tpu_info().vmem_capacity_bytes)
    except Exception:
        return 64 << 20   # conservative: v7x per-TensorCore VMEM


def _pick_block_rows(M):
    # ~512-row tiles: multiple of 256 (v6e/v7x MXU width) and 128 (v5e), big
    # enough to amortize the ~0.35 us/step grid overhead.  For mid-size M we
    # still emit >= 2 grid steps so v7x's two TensorCores both get work.
    if M <= 256:
        return M
    if M <= 1024:
        return _round_up(pl.cdiv(M, 2), 256)
    return 512


def prepare_params(params, dtype):
    """Cast params to `dtype` and pad hidden lanes to a multiple of 128.

    Call ONCE at init (not per step).  Returned shapes:
      w0: (dim, dim_p)   b0: (1, dim_p)
      w1: (dim_p, dim_p) b1: (1, dim_p)
      w2: (dim_p, dim)   b2: (1, dim)
    Zero padding is exact: padded lanes stay 0 through every layer.
    Passing dtype=jnp.bfloat16 with f32 activations is the opt-in fast-MXU
    path (changes numerics vs. the f32 PyTorch reference).
    """
    dim = params["w0"].shape[0]
    dim_p = max(128, _round_up(dim, 128))
    pad = dim_p - dim

    def cvt(x, pad_rows, pad_cols):
        x = x.astype(dtype)
        if pad_rows or pad_cols:
            x = jnp.pad(x, ((0, pad_rows), (0, pad_cols)))
        return x

    return {
        "w0": cvt(params["w0"], 0, pad), "b0": cvt(params["b0"], 0, pad),
        "w1": cvt(params["w1"], pad, pad), "b1": cvt(params["b1"], 0, pad),
        "w2": cvt(params["w2"], pad, 0), "b2": cvt(params["b2"], 0, 0),
    }


@functools.partial(jax.jit, static_argnames=("block_rows", "single_buffer_weights"))
def _operator_flow_impl(h, params, block_rows, single_buffer_weights):
    orig_shape = h.shape
    dim = orig_shape[-1]
    h2d = h.reshape(-1, dim)
    M = h2d.shape[0]
    dtype = h.dtype

    w0, b0 = params["w0"], params["b0"]
    w1, b1 = params["w1"], params["b1"]
    w2, b2 = params["w2"], params["b2"]
    dim_p = w1.shape[0]
    w_itemsize = jnp.dtype(w0.dtype).itemsize
    h_itemsize = jnp.dtype(dtype).itemsize
    w_elems = dim * dim_p + dim_p * dim_p + dim_p * dim + 2 * dim_p + dim

    cap = _vmem_capacity_bytes() - (8 << 20)   # headroom for compiler scratch

    def vmem_est(br):
        wb = w_elems * w_itemsize * (1 if single_buffer_weights else 2)
        tiles = 2 * 2 * br * dim * h_itemsize      # in/out tiles, double-buffered
        interm = 3 * br * dim_p * 4                # f32 temporaries
        return wb + tiles + interm

    if block_rows is None:
        block_rows = _pick_block_rows(M)
    # Shrink the row tile until the VMEM estimate fits (stay a multiple of 8).
    while block_rows > 8 and vmem_est(block_rows) > cap:
        block_rows = max(8, (block_rows // 2) & ~7)
    block_rows = min(block_rows, M)

    grid = (pl.cdiv(M, block_rows),)

    row_spec = pl.BlockSpec((block_rows, dim), lambda i: (i, 0))
    if single_buffer_weights:
        def const_spec(shape):
            # Constant index_map -> resident block; single buffer halves its
            # VMEM footprint (double-buffering buys nothing here).
            return pl.BlockSpec(shape, lambda i: (0, 0),
                                pipeline_mode=pl.Buffered(1))
    else:
        def const_spec(shape):
            return pl.BlockSpec(shape, lambda i: (0, 0))

    est = vmem_est(block_rows)
    vmem_limit = None
    if est > (12 << 20):            # v5e's default scoped limit is only 16 MiB
        vmem_limit = int(min(est + (8 << 20), cap))

    cost = pl.CostEstimate(
        flops=2 * M * (dim * dim_p + dim_p * dim_p + dim_p * dim),
        transcendentals=2 * M * dim_p,
        bytes_accessed=(2 * M * dim * h_itemsize
                        + (dim * dim_p + dim_p * dim_p + dim_p * dim) * w_itemsize),
    )

    out = pl.pallas_call(
        _operator_flow_kernel,
        out_shape=jax.ShapeDtypeStruct((M, dim), dtype),
        grid_spec=pltpu.PrefetchScalarGridSpec(
            num_scalar_prefetch=0,
            grid=grid,
            in_specs=[row_spec,
                      const_spec((dim, dim_p)), const_spec((1, dim_p)),
                      const_spec((dim_p, dim_p)), const_spec((1, dim_p)),
                      const_spec((dim_p, dim)), const_spec((1, dim))],
            out_specs=row_spec,
        ),
        compiler_params=pltpu.CompilerParams(
            dimension_semantics=("parallel",),
            vmem_limit_bytes=vmem_limit),
        cost_estimate=cost,
    )(h2d, w0, b0, w1, b1, w2, b2)

    return out.reshape(orig_shape)


_SINGLE_BUFFER_WEIGHTS_OK = True


def operator_flow(h, params, block_rows=None):
    """h: (..., dim).  params: output of prepare_params() (preferred) or the
    raw {w0,b0,w1,b1,w2,b2} dict (prepared on the fly, per-call cost)."""
    global _SINGLE_BUFFER_WEIGHTS_OK
    dim = h.shape[-1]
    dim_p = max(128, _round_up(dim, 128))
    looks_prepared = (
        params["w0"].shape == (dim, dim_p)
        and params["w1"].shape == (dim_p, dim_p)
        and params["w2"].shape == (dim_p, dim)
        and params["b2"].shape == (1, dim))
    if not looks_prepared:
        params = prepare_params(params, h.dtype)

    if _SINGLE_BUFFER_WEIGHTS_OK:
        try:
            return _operator_flow_impl(h, params, block_rows, True)
        except Exception:
            # pl.Buffered(1) unsupported by this build -> default buffering.
            _SINGLE_BUFFER_WEIGHTS_OK = False
    return _operator_flow_impl(h, params, block_rows, False)


def init_params(dim, dtype=jnp.float32, seed=0):
    """Deterministic init. Weights stored as (dim_in, dim_out) [pre-transposed]."""
    key = jax.random.PRNGKey(seed)
    keys = jax.random.split(key, 6)
    bound = float(dim) ** -0.5  # mimic nn.Linear default uniform bound

    def w(k):
        return jax.random.uniform(k, (dim, dim), dtype, -bound, bound)

    def b(k):
        return jax.random.uniform(k, (1, dim), dtype, -bound, bound)

    return {
        "w0": w(keys[0]), "b0": b(keys[1]),
        "w1": w(keys[2]), "b1": b(keys[3]),
        "w2": w(keys[4]), "b2": b(keys[5]),
    }


def _reference(h, params):
    """Pure-JAX reference (matches the PyTorch module, f32 math)."""
    x = h.astype(jnp.float32)
    for i in range(2):
        x = x @ params[f"w{i}"].astype(jnp.float32) + params[f"b{i}"].astype(jnp.float32)
        x = 0.5 * x * (1.0 + lax.erf(x * _INV_SQRT2))
    x = x @ params["w2"].astype(jnp.float32) + params["b2"].astype(jnp.float32)
    return (h.astype(jnp.float32) + x).astype(h.dtype)


if __name__ == "__main__":
    batch, seq, dim = 2, 8, 32
    key = jax.random.PRNGKey(0)
    h = jax.random.normal(key, (batch, seq, dim), dtype=jnp.float32)

    raw_params = init_params(dim, dtype=jnp.float32, seed=0)
    params = prepare_params(raw_params, h.dtype)   # one-time cast + lane pad

    out = operator_flow(h, params)
    out = jax.block_until_ready(out)

    ref = _reference(h.reshape(-1, dim), raw_params).reshape(batch, seq, dim)
    assert out.shape == h.shape
    assert jnp.allclose(out, ref, atol=1e-4, rtol=1e-4), "mismatch vs reference"

    print("KERNEL_OK")
</pallas_src>

<mosaic_0001>
module attributes {stable_mosaic.version = 11 : i64} {
  func.func @_operator_flow_kernel(%arg0: i32, %arg1: memref<16x32xf32, #tpu.memory_space<vmem>>, %arg2: memref<32x128xf32, #tpu.memory_space<vmem>>, %arg3: memref<1x128xf32, #tpu.memory_space<vmem>>, %arg4: memref<128x128xf32, #tpu.memory_space<vmem>>, %arg5: memref<1x128xf32, #tpu.memory_space<vmem>>, %arg6: memref<128x32xf32, #tpu.memory_space<vmem>>, %arg7: memref<1x32xf32, #tpu.memory_space<vmem>>, %arg8: memref<16x32xf32, #tpu.memory_space<vmem>>) attributes {dimension_semantics = [#tpu.dimension_semantics<parallel>], iteration_bounds = array<i64: 1>, scalar_prefetch = 0 : i64, scratch_operands = 0 : i64, tpu.core_type = #tpu.core_type<tc>, window_params = [{transform_indices = @transform_0, window_bounds = array<i64: 16, 32>}, {pipeline_mode = #tpu.pipeline_mode<synchronous>, transform_indices = @transform_1, window_bounds = array<i64: 32, 128>}, {pipeline_mode = #tpu.pipeline_mode<synchronous>, transform_indices = @transform_2, window_bounds = array<i64: 1, 128>}, {pipeline_mode = #tpu.pipeline_mode<synchronous>, transform_indices = @transform_3, window_bounds = array<i64: 128, 128>}, {pipeline_mode = #tpu.pipeline_mode<synchronous>, transform_indices = @transform_4, window_bounds = array<i64: 1, 128>}, {pipeline_mode = #tpu.pipeline_mode<synchronous>, transform_indices = @transform_5, window_bounds = array<i64: 128, 32>}, {pipeline_mode = #tpu.pipeline_mode<synchronous>, transform_indices = @transform_6, window_bounds = array<i64: 1, 32>}, {transform_indices = @transform_7, window_bounds = array<i64: 16, 32>}]} {
    %c0 = arith.constant 0 : index
    %c0_0 = arith.constant 0 : index
    %0 = vector.load %arg1[%c0, %c0_0] : memref<16x32xf32, #tpu.memory_space<vmem>>, vector<16x32xf32>
    %c0_1 = arith.constant 0 : index
    %c0_2 = arith.constant 0 : index
    %1 = vector.load %arg2[%c0_1, %c0_2] : memref<32x128xf32, #tpu.memory_space<vmem>>, vector<32x128xf32>
    %cst = arith.constant dense<0.000000e+00> : vector<16x128xf32>
    %2 = tpu.matmul %0, %1, %cst {dimension_numbers = #tpu.dot_dimension_numbers<[1], [0], [0], [1], [0, 0, 1, 1], [], []>} : vector<16x32xf32>, vector<32x128xf32>, vector<16x128xf32> -> vector<16x128xf32>
    %c0_3 = arith.constant 0 : index
    %c0_4 = arith.constant 0 : index
    %3 = vector.load %arg3[%c0_3, %c0_4] : memref<1x128xf32, #tpu.memory_space<vmem>>, vector<1x128xf32>
    %4 = vector.broadcast %3 : vector<1x128xf32> to vector<16x128xf32>
    %5 = arith.addf %2, %4 : vector<16x128xf32>
    %cst_5 = arith.constant 5.000000e-01 : f32
    %6 = vector.broadcast %cst_5 : f32 to vector<16x128xf32>
    %7 = arith.mulf %6, %5 : vector<16x128xf32>
    %cst_6 = arith.constant 0.707106769 : f32
    %8 = vector.broadcast %cst_6 : f32 to vector<16x128xf32>
    %9 = arith.mulf %5, %8 : vector<16x128xf32>
    %10 = math.erf %9 : vector<16x128xf32>
    %cst_7 = arith.constant 1.000000e+00 : f32
    %11 = vector.broadcast %cst_7 : f32 to vector<16x128xf32>
    %12 = arith.addf %11, %10 : vector<16x128xf32>
    %13 = arith.mulf %7, %12 : vector<16x128xf32>
    %c0_8 = arith.constant 0 : index
    %c0_9 = arith.constant 0 : index
    %14 = vector.load %arg4[%c0_8, %c0_9] : memref<128x128xf32, #tpu.memory_space<vmem>>, vector<128x128xf32>
    %cst_10 = arith.constant dense<0.000000e+00> : vector<16x128xf32>
    %15 = tpu.matmul %13, %14, %cst_10 {dimension_numbers = #tpu.dot_dimension_numbers<[1], [0], [0], [1], [0, 0, 1, 1], [], []>} : vector<16x128xf32>, vector<128x128xf32>, vector<16x128xf32> -> vector<16x128xf32>
    %c0_11 = arith.constant 0 : index
    %c0_12 = arith.constant 0 : index
    %16 = vector.load %arg5[%c0_11, %c0_12] : memref<1x128xf32, #tpu.memory_space<vmem>>, vector<1x128xf32>
    %17 = vector.broadcast %16 : vector<1x128xf32> to vector<16x128xf32>
    %18 = arith.addf %15, %17 : vector<16x128xf32>
    %cst_13 = arith.constant 5.000000e-01 : f32
    %19 = vector.broadcast %cst_13 : f32 to vector<16x128xf32>
    %20 = arith.mulf %19, %18 : vector<16x128xf32>
    %cst_14 = arith.constant 0.707106769 : f32
    %21 = vector.broadcast %cst_14 : f32 to vector<16x128xf32>
    %22 = arith.mulf %18, %21 : vector<16x128xf32>
    %23 = math.erf %22 : vector<16x128xf32>
    %cst_15 = arith.constant 1.000000e+00 : f32
    %24 = vector.broadcast %cst_15 : f32 to vector<16x128xf32>
    %25 = arith.addf %24, %23 : vector<16x128xf32>
    %26 = arith.mulf %20, %25 : vector<16x128xf32>
    %c0_16 = arith.constant 0 : index
    %c0_17 = arith.constant 0 : index
    %27 = vector.load %arg6[%c0_16, %c0_17] : memref<128x32xf32, #tpu.memory_space<vmem>>, vector<128x32xf32>
    %cst_18 = arith.constant dense<0.000000e+00> : vector<16x32xf32>
    %28 = tpu.matmul %26, %27, %cst_18 {dimension_numbers = #tpu.dot_dimension_numbers<[1], [0], [0], [1], [0, 0, 1, 1], [], []>} : vector<16x128xf32>, vector<128x32xf32>, vector<16x32xf32> -> vector<16x32xf32>
    %c0_19 = arith.constant 0 : index
    %c0_20 = arith.constant 0 : index
    %29 = vector.load %arg7[%c0_19, %c0_20] : memref<1x32xf32, #tpu.memory_space<vmem>>, vector<1x32xf32>
    %30 = vector.broadcast %29 : vector<1x32xf32> to vector<16x32xf32>
    %31 = arith.addf %28, %30 : vector<16x32xf32>
    %c0_21 = arith.constant 0 : index
    %c0_22 = arith.constant 0 : index
    %32 = vector.load %arg1[%c0_21, %c0_22] : memref<16x32xf32, #tpu.memory_space<vmem>>, vector<16x32xf32>
    %33 = arith.addf %32, %31 : vector<16x32xf32>
    %c0_23 = arith.constant 0 : index
    %c0_24 = arith.constant 0 : index
    %34 = vector.load %arg8[%c0_23, %c0_24] : memref<16x32xf32, #tpu.memory_space<vmem>>, vector<16x32xf32>
    tpu.vector_store %arg8[%c0_23, %c0_24], %33 {strides = array<i32>} : memref<16x32xf32, #tpu.memory_space<vmem>>, vector<16x32xf32>,
    return
  }
  func.func @transform_0(%arg0: i32) -> (i32, i32) {
    %c0_i32 = arith.constant 0 : i32
    %c0_i32_0 = arith.constant 0 : i32
    return %arg0, %c0_i32 : i32, i32
  }
  func.func @transform_1(%arg0: i32) -> (i32, i32) {
    %c0_i32 = arith.constant 0 : i32
    %c0_i32_0 = arith.constant 0 : i32
    %c0_i32_1 = arith.constant 0 : i32
    return %c0_i32, %c0_i32_0 : i32, i32
  }
  func.func @transform_2(%arg0: i32) -> (i32, i32) {
    %c0_i32 = arith.constant 0 : i32
    %c0_i32_0 = arith.constant 0 : i32
    %c0_i32_1 = arith.constant 0 : i32
    return %c0_i32, %c0_i32_0 : i32, i32
  }
  func.func @transform_3(%arg0: i32) -> (i32, i32) {
    %c0_i32 = arith.constant 0 : i32
    %c0_i32_0 = arith.constant 0 : i32
    %c0_i32_1 = arith.constant 0 : i32
    return %c0_i32, %c0_i32_0 : i32, i32
  }
  func.func @transform_4(%arg0: i32) -> (i32, i32) {
    %c0_i32 = arith.constant 0 : i32
    %c0_i32_0 = arith.constant 0 : i32
    %c0_i32_1 = arith.constant 0 : i32
    return %c0_i32, %c0_i32_0 : i32, i32
  }
  func.func @transform_5(%arg0: i32) -> (i32, i32) {
    %c0_i32 = arith.constant 0 : i32
    %c0_i32_0 = arith.constant 0 : i32
    %c0_i32_1 = arith.constant 0 : i32
    return %c0_i32, %c0_i32_0 : i32, i32
  }
  func.func @transform_6(%arg0: i32) -> (i32, i32) {
    %c0_i32 = arith.constant 0 : i32
    %c0_i32_0 = arith.constant 0 : i32
    %c0_i32_1 = arith.constant 0 : i32
    return %c0_i32, %c0_i32_0 : i32, i32
  }
  func.func @transform_7(%arg0: i32) -> (i32, i32) {
    %c0_i32 = arith.constant 0 : i32
    %c0_i32_0 = arith.constant 0 : i32
    return %arg0, %c0_i32 : i32, i32
  }
}

module attributes {stable_mosaic.version = 11 : i64} {
  func.func @_operator_flow_kernel(%arg0: i32, %arg1: memref<16x32xf32, #tpu.memory_space<vmem>>, %arg2: memref<32x128xf32, #tpu.memory_space<vmem>>, %arg3: memref<1x128xf32, #tpu.memory_space<vmem>>, %arg4: memref<128x128xf32, #tpu.memory_space<vmem>>, %arg5: memref<1x128xf32, #tpu.memory_space<vmem>>, %arg6: memref<128x32xf32, #tpu.memory_space<vmem>>, %arg7: memref<1x32xf32, #tpu.memory_space<vmem>>, %arg8: memref<16x32xf32, #tpu.memory_space<vmem>>) attributes {dimension_semantics = [#tpu.dimension_semantics<parallel>], iteration_bounds = array<i64: 1>, scalar_prefetch = 0 : i64, scratch_operands = 0 : i64, tpu.core_type = #tpu.core_type<tc>, window_params = [{transform_indices = @transform_0, window_bounds = array<i64: 16, 32>}, {pipeline_mode = #tpu.pipeline_mode<synchronous>, transform_indices = @transform_1, window_bounds = array<i64: 32, 128>}, {pipeline_mode = #tpu.pipeline_mode<synchronous>, transform_indices = @transform_2, window_bounds = array<i64: 1, 128>}, {pipeline_mode = #tpu.pipeline_mode<synchronous>, transform_indices = @transform_3, window_bounds = array<i64: 128, 128>}, {pipeline_mode = #tpu.pipeline_mode<synchronous>, transform_indices = @transform_4, window_bounds = array<i64: 1, 128>}, {pipeline_mode = #tpu.pipeline_mode<synchronous>, transform_indices = @transform_5, window_bounds = array<i64: 128, 32>}, {pipeline_mode = #tpu.pipeline_mode<synchronous>, transform_indices = @transform_6, window_bounds = array<i64: 1, 32>}, {transform_indices = @transform_7, window_bounds = array<i64: 16, 32>}]} {
    %c0 = arith.constant 0 : index
    %c0_0 = arith.constant 0 : index
    %0 = vector.load %arg1[%c0, %c0_0] : memref<16x32xf32, #tpu.memory_space<vmem>>, vector<16x32xf32>
    %c0_1 = arith.constant 0 : index
    %c0_2 = arith.constant 0 : index
    %1 = vector.load %arg2[%c0_1, %c0_2] : memref<32x128xf32, #tpu.memory_space<vmem>>, vector<32x128xf32>
    %cst = arith.constant dense<0.000000e+00> : vector<16x128xf32>
    %2 = tpu.matmul %0, %1, %cst {dimension_numbers = #tpu.dot_dimension_numbers<[1], [0], [0], [1], [0, 0, 1, 1], [], []>} : vector<16x32xf32>, vector<32x128xf32>, vector<16x128xf32> -> vector<16x128xf32>
    %c0_3 = arith.constant 0 : index
    %c0_4 = arith.constant 0 : index
    %3 = vector.load %arg3[%c0_3, %c0_4] : memref<1x128xf32, #tpu.memory_space<vmem>>, vector<1x128xf32>
    %4 = vector.broadcast %3 : vector<1x128xf32> to vector<16x128xf32>
    %5 = arith.addf %2, %4 : vector<16x128xf32>
    %cst_5 = arith.constant 5.000000e-01 : f32
    %6 = vector.broadcast %cst_5 : f32 to vector<16x128xf32>
    %7 = arith.mulf %6, %5 : vector<16x128xf32>
    %cst_6 = arith.constant 0.707106769 : f32
    %8 = vector.broadcast %cst_6 : f32 to vector<16x128xf32>
    %9 = arith.mulf %5, %8 : vector<16x128xf32>
    %10 = math.erf %9 : vector<16x128xf32>
    %cst_7 = arith.constant 1.000000e+00 : f32
    %11 = vector.broadcast %cst_7 : f32 to vector<16x128xf32>
    %12 = arith.addf %11, %10 : vector<16x128xf32>
    %13 = arith.mulf %7, %12 : vector<16x128xf32>
    %c0_8 = arith.constant 0 : index
    %c0_9 = arith.constant 0 : index
    %14 = vector.load %arg4[%c0_8, %c0_9] : memref<128x128xf32, #tpu.memory_space<vmem>>, vector<128x128xf32>
    %cst_10 = arith.constant dense<0.000000e+00> : vector<16x128xf32>
    %15 = tpu.matmul %13, %14, %cst_10 {dimension_numbers = #tpu.dot_dimension_numbers<[1], [0], [0], [1], [0, 0, 1, 1], [], []>} : vector<16x128xf32>, vector<128x128xf32>, vector<16x128xf32> -> vector<16x128xf32>
    %c0_11 = arith.constant 0 : index
    %c0_12 = arith.constant 0 : index
    %16 = vector.load %arg5[%c0_11, %c0_12] : memref<1x128xf32, #tpu.memory_space<vmem>>, vector<1x128xf32>
    %17 = vector.broadcast %16 : vector<1x128xf32> to vector<16x128xf32>
    %18 = arith.addf %15, %17 : vector<16x128xf32>
    %cst_13 = arith.constant 5.000000e-01 : f32
    %19 = vector.broadcast %cst_13 : f32 to vector<16x128xf32>
    %20 = arith.mulf %19, %18 : vector<16x128xf32>
    %cst_14 = arith.constant 0.707106769 : f32
    %21 = vector.broadcast %cst_14 : f32 to vector<16x128xf32>
    %22 = arith.mulf %18, %21 : vector<16x128xf32>
    %23 = math.erf %22 : vector<16x128xf32>
    %cst_15 = arith.constant 1.000000e+00 : f32
    %24 = vector.broadcast %cst_15 : f32 to vector<16x128xf32>
    %25 = arith.addf %24, %23 : vector<16x128xf32>
    %26 = arith.mulf %20, %25 : vector<16x128xf32>
    %c0_16 = arith.constant 0 : index
    %c0_17 = arith.constant 0 : index
    %27 = vector.load %arg6[%c0_16, %c0_17] : memref<128x32xf32, #tpu.memory_space<vmem>>, vector<128x32xf32>
    %cst_18 = arith.constant dense<0.000000e+00> : vector<16x32xf32>
    %28 = tpu.matmul %26, %27, %cst_18 {dimension_numbers = #tpu.dot_dimension_numbers<[1], [0], [0], [1], [0, 0, 1, 1], [], []>} : vector<16x128xf32>, vector<128x32xf32>, vector<16x32xf32> -> vector<16x32xf32>
    %c0_19 = arith.constant 0 : index
    %c0_20 = arith.constant 0 : index
    %29 = vector.load %arg7[%c0_19, %c0_20] : memref<1x32xf32, #tpu.memory_space<vmem>>, vector<1x32xf32>
    %30 = vector.broadcast %29 : vector<1x32xf32> to vector<16x32xf32>
    %31 = arith.addf %28, %30 : vector<16x32xf32>
    %c0_21 = arith.constant 0 : index
    %c0_22 = arith.constant 0 : index
    %32 = vector.load %arg1[%c0_21, %c0_22] : memref<16x32xf32, #tpu.memory_space<vmem>>, vector<16x32xf32>
    %33 = arith.addf %32, %31 : vector<16x32xf32>
    %c0_23 = arith.constant 0 : index
    %c0_24 = arith.constant 0 : index
    %34 = vector.load %arg8[%c0_23, %c0_24] : memref<16x32xf32, #tpu.memory_space<vmem>>, vector<16x32xf32>
    tpu.vector_store %arg8[%c0_23, %c0_24], %33 {strides = array<i32>} : memref<16x32xf32, #tpu.memory_space<vmem>>, vector<16x32xf32>,
    return
  }
  func.func @transform_0(%arg0: i32) -> (i32, i32) {
    %c0_i32 = arith.constant 0 : i32
    %c0_i32_0 = arith.constant 0 : i32
    return %arg0, %c0_i32 : i32, i32
  }
  func.func @transform_1(%arg0: i32) -> (i32, i32) {
    %c0_i32 = arith.constant 0 : i32
    %c0_i32_0 = arith.constant 0 : i32
    %c0_i32_1 = arith.constant 0 : i32
    return %c0_i32, %c0_i32_0 : i32, i32
  }
  func.func @transform_2(%arg0: i32) -> (i32, i32) {
    %c0_i32 = arith.constant 0 : i32
    %c0_i32_0 = arith.constant 0 : i32
    %c0_i32_1 = arith.constant 0 : i32
    return %c0_i32, %c0_i32_0 : i32, i32
  }
  func.func @transform_3(%arg0: i32) -> (i32, i32) {
    %c0_i32 = arith.constant 0 : i32
    %c0_i32_0 = arith.constant 0 : i32
    %c0_i32_1 = arith.constant 0 : i32
    return %c0_i32, %c0_i32_0 : i32, i32
  }
  func.func @transform_4(%arg0: i32) -> (i32, i32) {
    %c0_i32 = arith.constant 0 : i32
    %c0_i32_0 = arith.constant 0 : i32
    %c0_i32_1 = arith.constant 0 : i32
    return %c0_i32, %c0_i32_0 : i32, i32
  }
  func.func @transform_5(%arg0: i32) -> (i32, i32) {
    %c0_i32 = arith.constant 0 : i32
    %c0_i32_0 = arith.constant 0 : i32
    %c0_i32_1 = arith.constant 0 : i32
    return %c0_i32, %c0_i32_0 : i32, i32
  }
  func.func @transform_6(%arg0: i32) -> (i32, i32) {
    %c0_i32 = arith.constant 0 : i32
    %c0_i32_0 = arith.constant 0 : i32
    %c0_i32_1 = arith.constant 0 : i32
    return %c0_i32, %c0_i32_0 : i32, i32
  }
  func.func @transform_7(%arg0: i32) -> (i32, i32) {
    %c0_i32 = arith.constant 0 : i32
    %c0_i32_0 = arith.constant 0 : i32
    return %arg0, %c0_i32 : i32, i32
  }
}

</mosaic_0001>

<llo_original>
// kernel: _operator_flow_impl.1
$region0: #{_operator_flow_impl.1}
  #allocation0 [shape = 'u32[]', space=smem, size = 0x4, offset = 0x4, fixed_abs, tag = 'smem constant byte address 0x4 - core index']
  #allocation1 [shape = 'u32[144,128]{1,0:T(1,128)}', space=vmem, size = 0x12000, scoped, tag = 'internal scratch']
  %s0 = inlined_call_operand.vmem [shape: f32[16,32], index: 0, kind: input, shape index: {}]
  %s1 = inlined_call_operand.vmem [shape: f32[32,128], index: 1, kind: input, shape index: {}]
  %s2 = inlined_call_operand.vmem [shape: f32[1,128], index: 2, kind: input, shape index: {}]
  %s3 = inlined_call_operand.vmem [shape: f32[128,128], index: 3, kind: input, shape index: {}]
  %s4 = inlined_call_operand.vmem [shape: f32[1,128], index: 4, kind: input, shape index: {}]
  %s5 = inlined_call_operand.vmem [shape: f32[128,32], index: 5, kind: input, shape index: {}]
  %s6 = inlined_call_operand.vmem [shape: f32[1,32], index: 6, kind: input, shape index: {}]
  %s7 = inlined_call_operand.hbm [shape: f32[16,32], index: 7, kind: output, shape index: {}]
  %s8 = sld [smem:[#allocation0]]
  $region38: #{_operator_flow_impl.1} parent=0
    _
  %s10 = ssub.s32 1, %s8
  %s11 = scalar_select 0, %s10, %s8
  $region1: #{_operator_flow_impl.1} parent=0
    #allocation2 [shape = 'u8[8192]{0}', space=vmem, size = 0x2000, scoped, tag = 'output window, operand 0, single buffered']
    #allocation3 [shape = 's32[1]{0}', space=sflag, size = 0x4, scoped, tag = 'scoped memory for _operator_flow_impl.1']
    %12 = vsyncpa [#allocation3], 0
    // Predicated region
    $region2: #{_operator_flow_impl.1} parent=1 // pred_check
      _
    $region3: #{_operator_flow_impl.1} parent=1 // pred_check_branch
      %14 = sbr.rel (0) target = $region5
    $region4: #{_operator_flow_impl.1} parent=1 // pred_region
      _
    $region5: #{_operator_flow_impl.1} parent=1 // pred_fallthru
      _
    // Predicated region
    $region6: #{_operator_flow_impl.1} parent=1 // pred_check
      _
    $region7: #{_operator_flow_impl.1} parent=1 // pred_check_branch
      %16 = sbr.rel (0) target = $region9
    $region8: #{_operator_flow_impl.1} parent=1 // pred_region
      _
    $region9: #{_operator_flow_impl.1} parent=1 // pred_fallthru
      _
    // Predicated region
    $region10: #{_operator_flow_impl.1} parent=1 // pred_check
      _
    $region11: #{_operator_flow_impl.1} parent=1 // pred_check_branch
      %18 = sbr.rel (0) target = $region13
    $region12: #{_operator_flow_impl.1} parent=1 // pred_region
      _
    $region13: #{_operator_flow_impl.1} parent=1 // pred_fallthru
      _
    // Predicated region
    $region14: #{_operator_flow_impl.1} parent=1 // pred_check
      _
    $region15: #{_operator_flow_impl.1} parent=1 // pred_check_branch
      %20 = sbr.rel (0) target = $region17
    $region16: #{_operator_flow_impl.1} parent=1 // pred_region
      _
    $region17: #{_operator_flow_impl.1} parent=1 // pred_fallthru
      _
    // Predicated region
    $region18: #{_operator_flow_impl.1} parent=1 // pred_check
      _
    $region19: #{_operator_flow_impl.1} parent=1 // pred_check_branch
      %22 = sbr.rel (0) target = $region21
    $region20: #{_operator_flow_impl.1} parent=1 // pred_region
      _
    $region21: #{_operator_flow_impl.1} parent=1 // pred_fallthru
      _
    // Predicated region
    $region22: #{_operator_flow_impl.1} parent=1 // pred_check
      _
    $region23: #{_operator_flow_impl.1} parent=1 // pred_check_branch
      %24 = sbr.rel (0) target = $region25
    $region24: #{_operator_flow_impl.1} parent=1 // pred_region
      _
    $region25: #{_operator_flow_impl.1} parent=1 // pred_fallthru
      _
    // Predicated region
    $region26: #{_operator_flow_impl.1} parent=1 // pred_check
      _
    $region27: #{_operator_flow_impl.1} parent=1 // pred_check_branch
      %26 = sbr.rel (0) target = $region29
    $region28: #{_operator_flow_impl.1} parent=1 // pred_region
      _
    $region29: #{_operator_flow_impl.1} parent=1 // pred_fallthru
      _
    %v27 = vld [vmem:[%s0] sm:$0xff]
    %v28 = vld [vmem:[%s0 + $0x8] sm:$0xff]
    %v29 = vld [vmem:[%s1] sm:$0xff]
    %v30 = vld [vmem:[%s1 + $0x8] sm:$0xff]
    %v31 = vld [vmem:[%s1 + $0x10] sm:$0xff]
    %v32 = vld [vmem:[%s1 + $0x18] sm:$0xff]
    %v33 = vld [vmem:[%s2] sm:$0x1]
    %v35 = vlaneseq
    %v36 = vshrl.u32 %v35, 7
    %v37 = vsub.s32 0, %v36
    %v38 = vrot.slane %v33, %v37
    %vm40 = vcmask 261120
    %v42 = vsel %vm40, %v27, 0
    %v45 = vsel %vm40, %v28, 0
    %47 = vmatprep.subr.mxu0 0.0
    %48 = vmatpush1.msra.mxu0 %v29
    %49 = vmatprep.subr.mxu0 0.0
    %50 = vmatpush1.msra.mxu0 %v30
    %51 = vmatprep.subr.mxu0 0.0
    %52 = vmatpush1.msra.mxu0 %v31
    %53 = vmatprep.subr.mxu0 0.0
    %54 = vmatpush1.msra.mxu0 %v32
    %55 = vmatprep.subr.mxu0 0.0
    %56 = vmatpush1.msra.mxu0 0.0
    %57 = vmatprep.subr.mxu0 0.0
    %58 = vmatpush1.msra.mxu0 0.0
    %59 = vmatprep.subr.mxu0 0.0
    %60 = vmatpush1.msra.mxu0 0.0
    %61 = vmatprep.subr.mxu0 0.0
    %62 = vmatpush1.msra.mxu0 0.0
    %63 = vmatprep.subr.mxu0 0.0
    %64 = vmatpush1.msra.mxu0 0.0
    %65 = vmatprep.subr.mxu0 0.0
    %66 = vmatpush1.msra.mxu0 0.0
    %67 = vmatprep.subr.mxu0 0.0
    %68 = vmatpush1.msra.mxu0 0.0
    %69 = vmatprep.subr.mxu0 0.0
    %70 = vmatpush1.msra.mxu0 0.0
    %71 = vmatprep.subr.mxu0 0.0
    %72 = vmatpush1.msra.mxu0 0.0
    %73 = vmatprep.subr.mxu0 0.0
    %74 = vmatpush1.msra.mxu0 0.0
    %75 = vmatprep.subr.mxu0 0.0
    %76 = vmatpush1.msra.mxu0 0.0
    %77 = vmatprep.subr.mxu0 0.0
    %78 = vmatpush1.msra.mxu0 0.0
    %79 = vmatprep.subr.mxu0 0.0
    %80 = vmatpush1.msra.mxu0 0.0
    %81 = vmatprep.subr.mxu0 0.0
    %82 = vmatpush1.msra.mxu0 0.0
    %83 = vmatprep.subr.mxu0 0.0
    %84 = vmatpush1.msra.mxu0 0.0
    %85 = vmatprep.subr.mxu0 0.0
    %86 = vmatpush1.msra.mxu0 0.0
    %87 = vmatprep.subr.mxu0 0.0
    %88 = vmatpush1.msra.mxu0 0.0
    %89 = vmatprep.subr.mxu0 0.0
    %90 = vmatpush1.msra.mxu0 0.0
    %91 = vmatprep.subr.mxu0 0.0
    %92 = vmatpush1.msra.mxu0 0.0
    %93 = vmatprep.subr.mxu0 0.0
    %94 = vmatpush1.msra.mxu0 0.0
    %95 = vmatprep.subr.mxu0 0.0
    %96 = vmatpush1.msra.mxu0 0.0
    %97 = vmatprep.subr.mxu0 0.0
    %98 = vmatpush1.msra.mxu0 0.0
    %99 = vmatprep.subr.mxu0 0.0
    %100 = vmatpush1.msra.mxu0 0.0
    %101 = vmatprep.subr.mxu0 0.0
    %102 = vmatpush1.msra.mxu0 0.0
    %103 = vmatprep.subr.mxu0 0.0
    %104 = vmatpush1.msra.mxu0 0.0
    %105 = vmatprep.subr.mxu0 0.0
    %106 = vmatpush1.msra.mxu0 0.0
    %107 = vmatprep.subr.mxu0 0.0
    %108 = vmatpush1.msra.mxu0 0.0
    %109 = vmatprep.subr.mxu0 0.0
    %110 = vmatpush1.msra.mxu0 0.0
    %111 = vmatprep.mubr.f32.mxu0 0.0
    %112 = vmatmul.mubr.f32.gmra.mrb[0].mxu0 %v42
    %v113 = vpop.f32.mrb[0].mxu0
    %v114 = vadd.f32 %v38, %v113
    %v115 = vpop.f32.mrb[0].mxu0
    %116 = vmatprep.mubr.f32.mxu0 0.0
    %117 = vmatmul.mubr.f32.gmra.mrb[0].mxu0 %v45
    %v118 = vpop.f32.mrb[0].mxu0
    %v119 = vadd.f32 %v38, %v118
    %v120 = vpop.f32.mrb[0].mxu0
    %121 = vdwg.mxu0
    %v122 = vmul.f32 %v114, 0.5
    %v123 = vmul.f32 %v119, 0.5
    %v124 = vmul.f32 %v114, 0.70710677
    %v125 = vmul.f32 %v119, 0.70710677
    %v126 = verf.f32.pop %v124
    %v127 = verf.f32.pop %v125
    %v128 = vadd.f32 %v126, 1.0
    %v129 = vadd.f32 %v127, 1.0
    %v130 = vmul.f32 %v122, %v128
    %v131 = vmul.f32 %v123, %v129
    %v132 = vld [vmem:[%s3] sm:$0xff]
    %v133 = vld [vmem:[%s3 + $0x8] sm:$0xff]
    %v134 = vld [vmem:[%s3 + $0x10] sm:$0xff]
    %v135 = vld [vmem:[%s3 + $0x18] sm:$0xff]
    %v136 = vld [vmem:[%s3 + $0x20] sm:$0xff]
    %v137 = vld [vmem:[%s3 + $0x28] sm:$0xff]
    %v138 = vld [vmem:[%s3 + $0x30] sm:$0xff]
    %v139 = vld [vmem:[%s3 + $0x38] sm:$0xff]
    %v140 = vld [vmem:[%s3 + $0x40] sm:$0xff]
    %v141 = vld [vmem:[%s3 + $0x48] sm:$0xff]
    %v142 = vld [vmem:[%s3 + $0x50] sm:$0xff]
    %v143 = vld [vmem:[%s3 + $0x58] sm:$0xff]
    %v144 = vld [vmem:[%s3 + $0x60] sm:$0xff]
    %v145 = vld [vmem:[%s3 + $0x68] sm:$0xff]
    %v146 = vld [vmem:[%s3 + $0x70] sm:$0xff]
    %v147 = vld [vmem:[%s3 + $0x78] sm:$0xff]
    %v148 = vld [vmem:[%s4] sm:$0x1]
    %v150 = vlaneseq
    %v151 = vshrl.u32 %v150, 7
    %v152 = vsub.s32 0, %v151
    %v153 = vrot.slane %v148, %v152
    %155 = vmatprep.subr.mxu0 0.0
    %156 = vmatpush1.msra.mxu0 %v132
    %157 = vmatprep.subr.mxu0 0.0
    %158 = vmatpush1.msra.mxu0 %v133
    %159 = vmatprep.subr.mxu0 0.0
    %160 = vmatpush1.msra.mxu0 %v134
    %161 = vmatprep.subr.mxu0 0.0
    %162 = vmatpush1.msra.mxu0 %v135
    %163 = vmatprep.subr.mxu0 0.0
    %164 = vmatpush1.msra.mxu0 %v136
    %165 = vmatprep.subr.mxu0 0.0
    %166 = vmatpush1.msra.mxu0 %v137
    %167 = vmatprep.subr.mxu0 0.0
    %168 = vmatpush1.msra.mxu0 %v138
    %169 = vmatprep.subr.mxu0 0.0
    %170 = vmatpush1.msra.mxu0 %v139
    %171 = vmatprep.subr.mxu0 0.0
    %172 = vmatpush1.msra.mxu0 %v140
    %173 = vmatprep.subr.mxu0 0.0
    %174 = vmatpush1.msra.mxu0 %v141
    %175 = vmatprep.subr.mxu0 0.0
    %176 = vmatpush1.msra.mxu0 %v142
    %177 = vmatprep.subr.mxu0 0.0
    %178 = vmatpush1.msra.mxu0 %v143
    %179 = vmatprep.subr.mxu0 0.0
    %180 = vmatpush1.msra.mxu0 %v144
    %181 = vmatprep.subr.mxu0 0.0
    %182 = vmatpush1.msra.mxu0 %v145
    %183 = vmatprep.subr.mxu0 0.0
    %184 = vmatpush1.msra.mxu0 %v146
    %185 = vmatprep.subr.mxu0 0.0
    %186 = vmatpush1.msra.mxu0 %v147
    %187 = vmatprep.subr.mxu0 0.0
    %188 = vmatpush1.msra.mxu0 0.0
    %189 = vmatprep.subr.mxu0 0.0
    %190 = vmatpush1.msra.mxu0 0.0
    %191 = vmatprep.subr.mxu0 0.0
    %192 = vmatpush1.msra.mxu0 0.0
    %193 = vmatprep.subr.mxu0 0.0
    %194 = vmatpush1.msra.mxu0 0.0
    %195 = vmatprep.subr.mxu0 0.0
    %196 = vmatpush1.msra.mxu0 0.0
    %197 = vmatprep.subr.mxu0 0.0
    %198 = vmatpush1.msra.mxu0 0.0
    %199 = vmatprep.subr.mxu0 0.0
    %200 = vmatpush1.msra.mxu0 0.0
    %201 = vmatprep.subr.mxu0 0.0
    %202 = vmatpush1.msra.mxu0 0.0
    %203 = vmatprep.subr.mxu0 0.0
    %204 = vmatpush1.msra.mxu0 0.0
    %205 = vmatprep.subr.mxu0 0.0
    %206 = vmatpush1.msra.mxu0 0.0
    %207 = vmatprep.subr.mxu0 0.0
    %208 = vmatpush1.msra.mxu0 0.0
    %209 = vmatprep.subr.mxu0 0.0
    %210 = vmatpush1.msra.mxu0 0.0
    %211 = vmatprep.subr.mxu0 0.0
    %212 = vmatpush1.msra.mxu0 0.0
    %213 = vmatprep.subr.mxu0 0.0
    %214 = vmatpush1.msra.mxu0 0.0
    %215 = vmatprep.subr.mxu0 0.0
    %216 = vmatpush1.msra.mxu0 0.0
    %217 = vmatprep.subr.mxu0 0.0
    %218 = vmatpush1.msra.mxu0 0.0
    %219 = vmatprep.mubr.f32.mxu0 0.0
    %220 = vmatmul.mubr.f32.gmra.mrb[0].mxu0 %v130
    %v221 = vpop.f32.mrb[0].mxu0
    %v222 = vadd.f32 %v153, %v221
    %v223 = vpop.f32.mrb[0].mxu0
    %224 = vmatprep.mubr.f32.mxu0 0.0
    %225 = vmatmul.mubr.f32.gmra.mrb[0].mxu0 %v131
    %v226 = vpop.f32.mrb[0].mxu0
    %v227 = vadd.f32 %v153, %v226
    %v228 = vpop.f32.mrb[0].mxu0
    %229 = vdwg.mxu0
    %v230 = vmul.f32 %v222, 0.5
    %v231 = vmul.f32 %v227, 0.5
    %v232 = vmul.f32 %v222, 0.70710677
    %v233 = vmul.f32 %v227, 0.70710677
    %v234 = verf.f32.pop %v232
    %v235 = verf.f32.pop %v233
    %v236 = vadd.f32 %v234, 1.0
    %v237 = vadd.f32 %v235, 1.0
    %v238 = vmul.f32 %v230, %v236
    %v239 = vmul.f32 %v231, %v237
    %v240 = vld [vmem:[%s5] sm:$0xff]
    %v241 = vld [vmem:[%s5 + $0x8] sm:$0xff]
    %v242 = vld [vmem:[%s5 + $0x10] sm:$0xff]
    %v243 = vld [vmem:[%s5 + $0x18] sm:$0xff]
    %v244 = vld [vmem:[%s5 + $0x20] sm:$0xff]
    %v245 = vld [vmem:[%s5 + $0x28] sm:$0xff]
    %v246 = vld [vmem:[%s5 + $0x30] sm:$0xff]
    %v247 = vld [vmem:[%s5 + $0x38] sm:$0xff]
    %v248 = vld [vmem:[%s5 + $0x40] sm:$0xff]
    %v249 = vld [vmem:[%s5 + $0x48] sm:$0xff]
    %v250 = vld [vmem:[%s5 + $0x50] sm:$0xff]
    %v251 = vld [vmem:[%s5 + $0x58] sm:$0xff]
    %v252 = vld [vmem:[%s5 + $0x60] sm:$0xff]
    %v253 = vld [vmem:[%s5 + $0x68] sm:$0xff]
    %v254 = vld [vmem:[%s5 + $0x70] sm:$0xff]
    %v255 = vld [vmem:[%s5 + $0x78] sm:$0xff]
    %v256 = vld [vmem:[%s6] sm:$0x1]
    %v258 = vlaneseq
    %v259 = vshrl.u32 %v258, 7
    %v260 = vsub.s32 0, %v259
    %v261 = vrot.slane %v256, %v260
    %263 = vmatprep.subr.mxu0 0.0
    %264 = vmatpush1.msra.mxu0 %v240
    %265 = vmatprep.subr.mxu0 0.0
    %266 = vmatpush1.msra.mxu0 %v241
    %267 = vmatprep.subr.mxu0 0.0
    %268 = vmatpush1.msra.mxu0 %v242
    %269 = vmatprep.subr.mxu0 0.0
    %270 = vmatpush1.msra.mxu0 %v243
    %271 = vmatprep.subr.mxu0 0.0
    %272 = vmatpush1.msra.mxu0 %v244
    %273 = vmatprep.subr.mxu0 0.0
    %274 = vmatpush1.msra.mxu0 %v245
    %275 = vmatprep.subr.mxu0 0.0
    %276 = vmatpush1.msra.mxu0 %v246
    %277 = vmatprep.subr.mxu0 0.0
    %278 = vmatpush1.msra.mxu0 %v247
    %279 = vmatprep.subr.mxu0 0.0
    %280 = vmatpush1.msra.mxu0 %v248
    %281 = vmatprep.subr.mxu0 0.0
    %282 = vmatpush1.msra.mxu0 %v249
    %283 = vmatprep.subr.mxu0 0.0
    %284 = vmatpush1.msra.mxu0 %v250
    %285 = vmatprep.subr.mxu0 0.0
    %286 = vmatpush1.msra.mxu0 %v251
    %287 = vmatprep.subr.mxu0 0.0
    %288 = vmatpush1.msra.mxu0 %v252
    %289 = vmatprep.subr.mxu0 0.0
    %290 = vmatpush1.msra.mxu0 %v253
    %291 = vmatprep.subr.mxu0 0.0
    %292 = vmatpush1.msra.mxu0 %v254
    %293 = vmatprep.subr.mxu0 0.0
    %294 = vmatpush1.msra.mxu0 %v255
    %295 = vmatprep.subr.mxu0 0.0
    %296 = vmatpush1.msra.mxu0 0.0
    %297 = vmatprep.subr.mxu0 0.0
    %298 = vmatpush1.msra.mxu0 0.0
    %299 = vmatprep.subr.mxu0 0.0
    %300 = vmatpush1.msra.mxu0 0.0
    %301 = vmatprep.subr.mxu0 0.0
    %302 = vmatpush1.msra.mxu0 0.0
    %303 = vmatprep.subr.mxu0 0.0
    %304 = vmatpush1.msra.mxu0 0.0
    %305 = vmatprep.subr.mxu0 0.0
    %306 = vmatpush1.msra.mxu0 0.0
    %307 = vmatprep.subr.mxu0 0.0
    %308 = vmatpush1.msra.mxu0 0.0
    %309 = vmatprep.subr.mxu0 0.0
    %310 = vmatpush1.msra.mxu0 0.0
    %311 = vmatprep.subr.mxu0 0.0
    %312 = vmatpush1.msra.mxu0 0.0
    %313 = vmatprep.subr.mxu0 0.0
    %314 = vmatpush1.msra.mxu0 0.0
    %315 = vmatprep.subr.mxu0 0.0
    %316 = vmatpush1.msra.mxu0 0.0
    %317 = vmatprep.subr.mxu0 0.0
    %318 = vmatpush1.msra.mxu0 0.0
    %319 = vmatprep.subr.mxu0 0.0
    %320 = vmatpush1.msra.mxu0 0.0
    %321 = vmatprep.subr.mxu0 0.0
    %322 = vmatpush1.msra.mxu0 0.0
    %323 = vmatprep.subr.mxu0 0.0
    %324 = vmatpush1.msra.mxu0 0.0
    %325 = vmatprep.subr.mxu0 0.0
    %326 = vmatpush1.msra.mxu0 0.0
    %327 = vmatprep.mubr.f32.mxu0 0.0
    %328 = vmatmul.mubr.f32.gmra.mrb[0].mxu0 %v238
    %v329 = vpop.f32.mrb[0].mxu0
    %v330 = vadd.f32 %v261, %v329
    %v331 = vpop.f32.mrb[0].mxu0
    %332 = vmatprep.mubr.f32.mxu0 0.0
    %333 = vmatmul.mubr.f32.gmra.mrb[0].mxu0 %v239
    %v334 = vpop.f32.mrb[0].mxu0
    %v335 = vadd.f32 %v261, %v334
    %v336 = vpop.f32.mrb[0].mxu0
    %337 = vdwg.mxu0
    %v338 = vadd.f32 %v27, %v330
    %v339 = vadd.f32 %v28, %v335
    %340 = vst.msk [vmem:[#allocation2] sm:$0xff] %vm40, %v338
    %341 = vst.msk [vmem:[#allocation2 + $0x8] sm:$0xff] %vm40, %v339
    // Predicated region
    $region30: #{_operator_flow_impl.1} parent=1 // pred_check
      _
    $region31: #{_operator_flow_impl.1} parent=1 // pred_check_branch
      %343 = sbr.rel (0) target = $region33
    $region32: #{_operator_flow_impl.1} parent=1 // pred_region
      %s345 = ssub.s32 256, 256
      %346 = vsyncadd [#allocation3], %s345
      %s347 = sshll.u32 [#allocation2], 4
      %s348 = int_to_ptr.vmem [resolvable:$true] %s347
      %353 = dma.vmem_to_hbm [thread:$0]  %s348, 256, %s7, [#allocation3], 128, 128, 8
    $region33: #{_operator_flow_impl.1} parent=1 // pred_fallthru
      _
    // Predicated region
    $region34: #{_operator_flow_impl.1} parent=1 // pred_check
      _
    $region35: #{_operator_flow_impl.1} parent=1 // pred_check_branch
      %355 = sbr.rel (0) target = $region37
    $region36: #{_operator_flow_impl.1} parent=1 // pred_region
      %356 = dma.done [#allocation3], 256
    $region37: #{_operator_flow_impl.1} parent=1 // pred_fallthru
      _
    %357 = vsyncpa [#allocation3], 1

// kernel: _operator_flow_impl.1
$region0: #{_operator_flow_impl.1}
  #allocation0 [shape = 'u32[]', space=smem, size = 0x4, offset = 0x4, fixed_abs, tag = 'smem constant byte address 0x4 - core index']
  #allocation1 [shape = 'u32[144,128]{1,0:T(1,128)}', space=vmem, size = 0x12000, scoped, tag = 'internal scratch']
  %s0 = inlined_call_operand.vmem [shape: f32[16,32], index: 0, kind: input, shape index: {}]
  %s1 = inlined_call_operand.vmem [shape: f32[32,128], index: 1, kind: input, shape index: {}]
  %s2 = inlined_call_operand.vmem [shape: f32[1,128], index: 2, kind: input, shape index: {}]
  %s3 = inlined_call_operand.vmem [shape: f32[128,128], index: 3, kind: input, shape index: {}]
  %s4 = inlined_call_operand.vmem [shape: f32[1,128], index: 4, kind: input, shape index: {}]
  %s5 = inlined_call_operand.vmem [shape: f32[128,32], index: 5, kind: input, shape index: {}]
  %s6 = inlined_call_operand.vmem [shape: f32[1,32], index: 6, kind: input, shape index: {}]
  %s7 = inlined_call_operand.hbm [shape: f32[16,32], index: 7, kind: output, shape index: {}]
  %s8 = sld [smem:[#allocation0]]
  $region38: #{_operator_flow_impl.1} parent=0
    _
  %s10 = ssub.s32 1, %s8
  %s11 = scalar_select 0, %s10, %s8
  $region1: #{_operator_flow_impl.1} parent=0
    #allocation2 [shape = 'u8[8192]{0}', space=vmem, size = 0x2000, scoped, tag = 'output window, operand 0, single buffered']
    #allocation3 [shape = 's32[1]{0}', space=sflag, size = 0x4, scoped, tag = 'scoped memory for _operator_flow_impl.1']
    %12 = vsyncpa [#allocation3], 0
    // Predicated region
    $region2: #{_operator_flow_impl.1} parent=1 // pred_check
      _
    $region3: #{_operator_flow_impl.1} parent=1 // pred_check_branch
      %14 = sbr.rel (0) target = $region5
    $region4: #{_operator_flow_impl.1} parent=1 // pred_region
      _
    $region5: #{_operator_flow_impl.1} parent=1 // pred_fallthru
      _
    // Predicated region
    $region6: #{_operator_flow_impl.1} parent=1 // pred_check
      _
    $region7: #{_operator_flow_impl.1} parent=1 // pred_check_branch
      %16 = sbr.rel (0) target = $region9
    $region8: #{_operator_flow_impl.1} parent=1 // pred_region
      _
    $region9: #{_operator_flow_impl.1} parent=1 // pred_fallthru
      _
    // Predicated region
    $region10: #{_operator_flow_impl.1} parent=1 // pred_check
      _
    $region11: #{_operator_flow_impl.1} parent=1 // pred_check_branch
      %18 = sbr.rel (0) target = $region13
    $region12: #{_operator_flow_impl.1} parent=1 // pred_region
      _
    $region13: #{_operator_flow_impl.1} parent=1 // pred_fallthru
      _
    // Predicated region
    $region14: #{_operator_flow_impl.1} parent=1 // pred_check
      _
    $region15: #{_operator_flow_impl.1} parent=1 // pred_check_branch
      %20 = sbr.rel (0) target = $region17
    $region16: #{_operator_flow_impl.1} parent=1 // pred_region
      _
    $region17: #{_operator_flow_impl.1} parent=1 // pred_fallthru
      _
    // Predicated region
    $region18: #{_operator_flow_impl.1} parent=1 // pred_check
      _
    $region19: #{_operator_flow_impl.1} parent=1 // pred_check_branch
      %22 = sbr.rel (0) target = $region21
    $region20: #{_operator_flow_impl.1} parent=1 // pred_region
      _
    $region21: #{_operator_flow_impl.1} parent=1 // pred_fallthru
      _
    // Predicated region
    $region22: #{_operator_flow_impl.1} parent=1 // pred_check
      _
    $region23: #{_operator_flow_impl.1} parent=1 // pred_check_branch
      %24 = sbr.rel (0) target = $region25
    $region24: #{_operator_flow_impl.1} parent=1 // pred_region
      _
    $region25: #{_operator_flow_impl.1} parent=1 // pred_fallthru
      _
    // Predicated region
    $region26: #{_operator_flow_impl.1} parent=1 // pred_check
      _
    $region27: #{_operator_flow_impl.1} parent=1 // pred_check_branch
      %26 = sbr.rel (0) target = $region29
    $region28: #{_operator_flow_impl.1} parent=1 // pred_region
      _
    $region29: #{_operator_flow_impl.1} parent=1 // pred_fallthru
      _
    %v27 = vld [vmem:[%s0] sm:$0xff]
    %v28 = vld [vmem:[%s0 + $0x8] sm:$0xff]
    %v29 = vld [vmem:[%s1] sm:$0xff]
    %v30 = vld [vmem:[%s1 + $0x8] sm:$0xff]
    %v31 = vld [vmem:[%s1 + $0x10] sm:$0xff]
    %v32 = vld [vmem:[%s1 + $0x18] sm:$0xff]
    %v33 = vld [vmem:[%s2] sm:$0x1]
    %v35 = vlaneseq
    %v36 = vshrl.u32 %v35, 7
    %v37 = vsub.s32 0, %v36
    %v38 = vrot.slane %v33, %v37
    %vm40 = vcmask 261120
    %v42 = vsel %vm40, %v27, 0
    %v45 = vsel %vm40, %v28, 0
    %47 = vmatprep.subr.mxu0 0.0
    %48 = vmatpush1.msra.mxu0 %v29
    %49 = vmatprep.subr.mxu0 0.0
    %50 = vmatpush1.msra.mxu0 %v30
    %51 = vmatprep.subr.mxu0 0.0
    %52 = vmatpush1.msra.mxu0 %v31
    %53 = vmatprep.subr.mxu0 0.0
    %54 = vmatpush1.msra.mxu0 %v32
    %55 = vmatprep.subr.mxu0 0.0
    %56 = vmatpush1.msra.mxu0 0.0
    %57 = vmatprep.subr.mxu0 0.0
    %58 = vmatpush1.msra.mxu0 0.0
    %59 = vmatprep.subr.mxu0 0.0
    %60 = vmatpush1.msra.mxu0 0.0
    %61 = vmatprep.subr.mxu0 0.0
    %62 = vmatpush1.msra.mxu0 0.0
    %63 = vmatprep.subr.mxu0 0.0
    %64 = vmatpush1.msra.mxu0 0.0
    %65 = vmatprep.subr.mxu0 0.0
    %66 = vmatpush1.msra.mxu0 0.0
    %67 = vmatprep.subr.mxu0 0.0
    %68 = vmatpush1.msra.mxu0 0.0
    %69 = vmatprep.subr.mxu0 0.0
    %70 = vmatpush1.msra.mxu0 0.0
    %71 = vmatprep.subr.mxu0 0.0
    %72 = vmatpush1.msra.mxu0 0.0
    %73 = vmatprep.subr.mxu0 0.0
    %74 = vmatpush1.msra.mxu0 0.0
    %75 = vmatprep.subr.mxu0 0.0
    %76 = vmatpush1.msra.mxu0 0.0
    %77 = vmatprep.subr.mxu0 0.0
    %78 = vmatpush1.msra.mxu0 0.0
    %79 = vmatprep.subr.mxu0 0.0
    %80 = vmatpush1.msra.mxu0 0.0
    %81 = vmatprep.subr.mxu0 0.0
    %82 = vmatpush1.msra.mxu0 0.0
    %83 = vmatprep.subr.mxu0 0.0
    %84 = vmatpush1.msra.mxu0 0.0
    %85 = vmatprep.subr.mxu0 0.0
    %86 = vmatpush1.msra.mxu0 0.0
    %87 = vmatprep.subr.mxu0 0.0
    %88 = vmatpush1.msra.mxu0 0.0
    %89 = vmatprep.subr.mxu0 0.0
    %90 = vmatpush1.msra.mxu0 0.0
    %91 = vmatprep.subr.mxu0 0.0
    %92 = vmatpush1.msra.mxu0 0.0
    %93 = vmatprep.subr.mxu0 0.0
    %94 = vmatpush1.msra.mxu0 0.0
    %95 = vmatprep.subr.mxu0 0.0
    %96 = vmatpush1.msra.mxu0 0.0
    %97 = vmatprep.subr.mxu0 0.0
    %98 = vmatpush1.msra.mxu0 0.0
    %99 = vmatprep.subr.mxu0 0.0
    %100 = vmatpush1.msra.mxu0 0.0
    %101 = vmatprep.subr.mxu0 0.0
    %102 = vmatpush1.msra.mxu0 0.0
    %103 = vmatprep.subr.mxu0 0.0
    %104 = vmatpush1.msra.mxu0 0.0
    %105 = vmatprep.subr.mxu0 0.0
    %106 = vmatpush1.msra.mxu0 0.0
    %107 = vmatprep.subr.mxu0 0.0
    %108 = vmatpush1.msra.mxu0 0.0
    %109 = vmatprep.subr.mxu0 0.0
    %110 = vmatpush1.msra.mxu0 0.0
    %111 = vmatprep.mubr.f32.mxu0 0.0
    %112 = vmatmul.mubr.f32.gmra.mrb[0].mxu0 %v42
    %v113 = vpop.f32.mrb[0].mxu0
    %v114 = vadd.f32 %v38, %v113
    %v115 = vpop.f32.mrb[0].mxu0
    %116 = vmatprep.mubr.f32.mxu0 0.0
    %117 = vmatmul.mubr.f32.gmra.mrb[0].mxu0 %v45
    %v118 = vpop.f32.mrb[0].mxu0
    %v119 = vadd.f32 %v38, %v118
    %v120 = vpop.f32.mrb[0].mxu0
    %121 = vdwg.mxu0
    %v122 = vmul.f32 %v114, 0.5
    %v123 = vmul.f32 %v119, 0.5
    %v124 = vmul.f32 %v114, 0.70710677
    %v125 = vmul.f32 %v119, 0.70710677
    %v126 = verf.f32.pop %v124
    %v127 = verf.f32.pop %v125
    %v128 = vadd.f32 %v126, 1.0
    %v129 = vadd.f32 %v127, 1.0
    %v130 = vmul.f32 %v122, %v128
    %v131 = vmul.f32 %v123, %v129
    %v132 = vld [vmem:[%s3] sm:$0xff]
    %v133 = vld [vmem:[%s3 + $0x8] sm:$0xff]
    %v134 = vld [vmem:[%s3 + $0x10] sm:$0xff]
    %v135 = vld [vmem:[%s3 + $0x18] sm:$0xff]
    %v136 = vld [vmem:[%s3 + $0x20] sm:$0xff]
    %v137 = vld [vmem:[%s3 + $0x28] sm:$0xff]
    %v138 = vld [vmem:[%s3 + $0x30] sm:$0xff]
    %v139 = vld [vmem:[%s3 + $0x38] sm:$0xff]
    %v140 = vld [vmem:[%s3 + $0x40] sm:$0xff]
    %v141 = vld [vmem:[%s3 + $0x48] sm:$0xff]
    %v142 = vld [vmem:[%s3 + $0x50] sm:$0xff]
    %v143 = vld [vmem:[%s3 + $0x58] sm:$0xff]
    %v144 = vld [vmem:[%s3 + $0x60] sm:$0xff]
    %v145 = vld [vmem:[%s3 + $0x68] sm:$0xff]
    %v146 = vld [vmem:[%s3 + $0x70] sm:$0xff]
    %v147 = vld [vmem:[%s3 + $0x78] sm:$0xff]
    %v148 = vld [vmem:[%s4] sm:$0x1]
    %v150 = vlaneseq
    %v151 = vshrl.u32 %v150, 7
    %v152 = vsub.s32 0, %v151
    %v153 = vrot.slane %v148, %v152
    %155 = vmatprep.subr.mxu0 0.0
    %156 = vmatpush1.msra.mxu0 %v132
    %157 = vmatprep.subr.mxu0 0.0
    %158 = vmatpush1.msra.mxu0 %v133
    %159 = vmatprep.subr.mxu0 0.0
    %160 = vmatpush1.msra.mxu0 %v134
    %161 = vmatprep.subr.mxu0 0.0
    %162 = vmatpush1.msra.mxu0 %v135
    %163 = vmatprep.subr.mxu0 0.0
    %164 = vmatpush1.msra.mxu0 %v136
    %165 = vmatprep.subr.mxu0 0.0
    %166 = vmatpush1.msra.mxu0 %v137
    %167 = vmatprep.subr.mxu0 0.0
    %168 = vmatpush1.msra.mxu0 %v138
    %169 = vmatprep.subr.mxu0 0.0
    %170 = vmatpush1.msra.mxu0 %v139
    %171 = vmatprep.subr.mxu0 0.0
    %172 = vmatpush1.msra.mxu0 %v140
    %173 = vmatprep.subr.mxu0 0.0
    %174 = vmatpush1.msra.mxu0 %v141
    %175 = vmatprep.subr.mxu0 0.0
    %176 = vmatpush1.msra.mxu0 %v142
    %177 = vmatprep.subr.mxu0 0.0
    %178 = vmatpush1.msra.mxu0 %v143
    %179 = vmatprep.subr.mxu0 0.0
    %180 = vmatpush1.msra.mxu0 %v144
    %181 = vmatprep.subr.mxu0 0.0
    %182 = vmatpush1.msra.mxu0 %v145
    %183 = vmatprep.subr.mxu0 0.0
    %184 = vmatpush1.msra.mxu0 %v146
    %185 = vmatprep.subr.mxu0 0.0
    %186 = vmatpush1.msra.mxu0 %v147
    %187 = vmatprep.subr.mxu0 0.0
    %188 = vmatpush1.msra.mxu0 0.0
    %189 = vmatprep.subr.mxu0 0.0
    %190 = vmatpush1.msra.mxu0 0.0
    %191 = vmatprep.subr.mxu0 0.0
    %192 = vmatpush1.msra.mxu0 0.0
    %193 = vmatprep.subr.mxu0 0.0
    %194 = vmatpush1.msra.mxu0 0.0
    %195 = vmatprep.subr.mxu0 0.0
    %196 = vmatpush1.msra.mxu0 0.0
    %197 = vmatprep.subr.mxu0 0.0
    %198 = vmatpush1.msra.mxu0 0.0
    %199 = vmatprep.subr.mxu0 0.0
    %200 = vmatpush1.msra.mxu0 0.0
    %201 = vmatprep.subr.mxu0 0.0
    %202 = vmatpush1.msra.mxu0 0.0
    %203 = vmatprep.subr.mxu0 0.0
    %204 = vmatpush1.msra.mxu0 0.0
    %205 = vmatprep.subr.mxu0 0.0
    %206 = vmatpush1.msra.mxu0 0.0
    %207 = vmatprep.subr.mxu0 0.0
    %208 = vmatpush1.msra.mxu0 0.0
    %209 = vmatprep.subr.mxu0 0.0
    %210 = vmatpush1.msra.mxu0 0.0
    %211 = vmatprep.subr.mxu0 0.0
    %212 = vmatpush1.msra.mxu0 0.0
    %213 = vmatprep.subr.mxu0 0.0
    %214 = vmatpush1.msra.mxu0 0.0
    %215 = vmatprep.subr.mxu0 0.0
    %216 = vmatpush1.msra.mxu0 0.0
    %217 = vmatprep.subr.mxu0 0.0
    %218 = vmatpush1.msra.mxu0 0.0
    %219 = vmatprep.mubr.f32.mxu0 0.0
    %220 = vmatmul.mubr.f32.gmra.mrb[0].mxu0 %v130
    %v221 = vpop.f32.mrb[0].mxu0
    %v222 = vadd.f32 %v153, %v221
    %v223 = vpop.f32.mrb[0].mxu0
    %224 = vmatprep.mubr.f32.mxu0 0.0
    %225 = vmatmul.mubr.f32.gmra.mrb[0].mxu0 %v131
    %v226 = vpop.f32.mrb[0].mxu0
    %v227 = vadd.f32 %v153, %v226
    %v228 = vpop.f32.mrb[0].mxu0
    %229 = vdwg.mxu0
    %v230 = vmul.f32 %v222, 0.5
    %v231 = vmul.f32 %v227, 0.5
    %v232 = vmul.f32 %v222, 0.70710677
    %v233 = vmul.f32 %v227, 0.70710677
    %v234 = verf.f32.pop %v232
    %v235 = verf.f32.pop %v233
    %v236 = vadd.f32 %v234, 1.0
    %v237 = vadd.f32 %v235, 1.0
    %v238 = vmul.f32 %v230, %v236
    %v239 = vmul.f32 %v231, %v237
    %v240 = vld [vmem:[%s5] sm:$0xff]
    %v241 = vld [vmem:[%s5 + $0x8] sm:$0xff]
    %v242 = vld [vmem:[%s5 + $0x10] sm:$0xff]
    %v243 = vld [vmem:[%s5 + $0x18] sm:$0xff]
    %v244 = vld [vmem:[%s5 + $0x20] sm:$0xff]
    %v245 = vld [vmem:[%s5 + $0x28] sm:$0xff]
    %v246 = vld [vmem:[%s5 + $0x30] sm:$0xff]
    %v247 = vld [vmem:[%s5 + $0x38] sm:$0xff]
    %v248 = vld [vmem:[%s5 + $0x40] sm:$0xff]
    %v249 = vld [vmem:[%s5 + $0x48] sm:$0xff]
    %v250 = vld [vmem:[%s5 + $0x50] sm:$0xff]
    %v251 = vld [vmem:[%s5 + $0x58] sm:$0xff]
    %v252 = vld [vmem:[%s5 + $0x60] sm:$0xff]
    %v253 = vld [vmem:[%s5 + $0x68] sm:$0xff]
    %v254 = vld [vmem:[%s5 + $0x70] sm:$0xff]
    %v255 = vld [vmem:[%s5 + $0x78] sm:$0xff]
    %v256 = vld [vmem:[%s6] sm:$0x1]
    %v258 = vlaneseq
    %v259 = vshrl.u32 %v258, 7
    %v260 = vsub.s32 0, %v259
    %v261 = vrot.slane %v256, %v260
    %263 = vmatprep.subr.mxu0 0.0
    %264 = vmatpush1.msra.mxu0 %v240
    %265 = vmatprep.subr.mxu0 0.0
    %266 = vmatpush1.msra.mxu0 %v241
    %267 = vmatprep.subr.mxu0 0.0
    %268 = vmatpush1.msra.mxu0 %v242
    %269 = vmatprep.subr.mxu0 0.0
    %270 = vmatpush1.msra.mxu0 %v243
    %271 = vmatprep.subr.mxu0 0.0
    %272 = vmatpush1.msra.mxu0 %v244
    %273 = vmatprep.subr.mxu0 0.0
    %274 = vmatpush1.msra.mxu0 %v245
    %275 = vmatprep.subr.mxu0 0.0
    %276 = vmatpush1.msra.mxu0 %v246
    %277 = vmatprep.subr.mxu0 0.0
    %278 = vmatpush1.msra.mxu0 %v247
    %279 = vmatprep.subr.mxu0 0.0
    %280 = vmatpush1.msra.mxu0 %v248
    %281 = vmatprep.subr.mxu0 0.0
    %282 = vmatpush1.msra.mxu0 %v249
    %283 = vmatprep.subr.mxu0 0.0
    %284 = vmatpush1.msra.mxu0 %v250
    %285 = vmatprep.subr.mxu0 0.0
    %286 = vmatpush1.msra.mxu0 %v251
    %287 = vmatprep.subr.mxu0 0.0
    %288 = vmatpush1.msra.mxu0 %v252
    %289 = vmatprep.subr.mxu0 0.0
    %290 = vmatpush1.msra.mxu0 %v253
    %291 = vmatprep.subr.mxu0 0.0
    %292 = vmatpush1.msra.mxu0 %v254
    %293 = vmatprep.subr.mxu0 0.0
    %294 = vmatpush1.msra.mxu0 %v255
    %295 = vmatprep.subr.mxu0 0.0
    %296 = vmatpush1.msra.mxu0 0.0
    %297 = vmatprep.subr.mxu0 0.0
    %298 = vmatpush1.msra.mxu0 0.0
    %299 = vmatprep.subr.mxu0 0.0
    %300 = vmatpush1.msra.mxu0 0.0
    %301 = vmatprep.subr.mxu0 0.0
    %302 = vmatpush1.msra.mxu0 0.0
    %303 = vmatprep.subr.mxu0 0.0
    %304 = vmatpush1.msra.mxu0 0.0
    %305 = vmatprep.subr.mxu0 0.0
    %306 = vmatpush1.msra.mxu0 0.0
    %307 = vmatprep.subr.mxu0 0.0
    %308 = vmatpush1.msra.mxu0 0.0
    %309 = vmatprep.subr.mxu0 0.0
    %310 = vmatpush1.msra.mxu0 0.0
    %311 = vmatprep.subr.mxu0 0.0
    %312 = vmatpush1.msra.mxu0 0.0
    %313 = vmatprep.subr.mxu0 0.0
    %314 = vmatpush1.msra.mxu0 0.0
    %315 = vmatprep.subr.mxu0 0.0
    %316 = vmatpush1.msra.mxu0 0.0
    %317 = vmatprep.subr.mxu0 0.0
    %318 = vmatpush1.msra.mxu0 0.0
    %319 = vmatprep.subr.mxu0 0.0
    %320 = vmatpush1.msra.mxu0 0.0
    %321 = vmatprep.subr.mxu0 0.0
    %322 = vmatpush1.msra.mxu0 0.0
    %323 = vmatprep.subr.mxu0 0.0
    %324 = vmatpush1.msra.mxu0 0.0
    %325 = vmatprep.subr.mxu0 0.0
    %326 = vmatpush1.msra.mxu0 0.0
    %327 = vmatprep.mubr.f32.mxu0 0.0
    %328 = vmatmul.mubr.f32.gmra.mrb[0].mxu0 %v238
    %v329 = vpop.f32.mrb[0].mxu0
    %v330 = vadd.f32 %v261, %v329
    %v331 = vpop.f32.mrb[0].mxu0
    %332 = vmatprep.mubr.f32.mxu0 0.0
    %333 = vmatmul.mubr.f32.gmra.mrb[0].mxu0 %v239
    %v334 = vpop.f32.mrb[0].mxu0
    %v335 = vadd.f32 %v261, %v334
    %v336 = vpop.f32.mrb[0].mxu0
    %337 = vdwg.mxu0
    %v338 = vadd.f32 %v27, %v330
    %v339 = vadd.f32 %v28, %v335
    %340 = vst.msk [vmem:[#allocation2] sm:$0xff] %vm40, %v338
    %341 = vst.msk [vmem:[#allocation2 + $0x8] sm:$0xff] %vm40, %v339
    // Predicated region
    $region30: #{_operator_flow_impl.1} parent=1 // pred_check
      _
    $region31: #{_operator_flow_impl.1} parent=1 // pred_check_branch
      %343 = sbr.rel (0) target = $region33
    $region32: #{_operator_flow_impl.1} parent=1 // pred_region
      %s345 = ssub.s32 256, 256
      %346 = vsyncadd [#allocation3], %s345
      %s347 = sshll.u32 [#allocation2], 4
      %s348 = int_to_ptr.vmem [resolvable:$true] %s347
      %353 = dma.vmem_to_hbm [thread:$0]  %s348, 256, %s7, [#allocation3], 128, 128, 8
    $region33: #{_operator_flow_impl.1} parent=1 // pred_fallthru
      _
    // Predicated region
    $region34: #{_operator_flow_impl.1} parent=1 // pred_check
      _
    $region35: #{_operator_flow_impl.1} parent=1 // pred_check_branch
      %355 = sbr.rel (0) target = $region37
    $region36: #{_operator_flow_impl.1} parent=1 // pred_region
      %356 = dma.done [#allocation3], 256
    $region37: #{_operator_flow_impl.1} parent=1 // pred_fallthru
      _
    %357 = vsyncpa [#allocation3], 1

</llo_original>
